<compile_context>
chip_gen: v6e
topology: v6e:2x2x1
jax: 0.10.0
libtpu: 0.0.40
codegen_flags: <defaults>
</compile_context>

<pallas_src>
import functools

import jax
import jax.numpy as jnp
from jax.experimental import pallas as pl
from jax.experimental.pallas import tpu as pltpu

_LANE = 128
_SUBLANE = 8


def _round_up(x, m):
    return (x + m - 1) // m * m


# ------------------------------- kernel --------------------------------------

def dmf_kernel(x1_ref, x2_ref, d_ref,
               w11_ref, b11_ref, w12_ref, b12_ref,
               wout_ref, bout_ref, out_ref, *, F_pad):
    """One batch tile of the DMF forward.

    All expert/class boundaries are padded to 128-lane multiples, so every
    slice / concat below is vreg-aligned (no XLU relayouts).
    """
    tile = d_ref.shape[0]
    # Broadcast distance once (reused by both branch mixes).
    d = jnp.broadcast_to(d_ref[...], (tile, F_pad))          # [T, F_pad] f32

    # Branch 1: one merged matmul  x1 @ [W0 | W1] -> [T, 2*F_pad], bias folded.
    h1 = jnp.dot(x1_ref[...], w11_ref[...],
                 preferred_element_type=jnp.float32) + b11_ref[...]
    h1a, h1b = h1[:, :F_pad], h1[:, F_pad:]                  # lane-aligned split
    ff1 = jnp.maximum(h1b + d * (h1a - h1b), 0.0)            # d*a + (1-d)*b

    # Branch 2.
    h2 = jnp.dot(x2_ref[...], w12_ref[...],
                 preferred_element_type=jnp.float32) + b12_ref[...]
    h2a, h2b = h2[:, :F_pad], h2[:, F_pad:]
    ff2 = jnp.maximum(h2b + d * (h2a - h2b), 0.0)

    # Fused output matmul: [ff1 | ff2 | ff1*ff2] @ [3*F_pad, C_pad] + b21.
    # Concat boundaries are multiples of 128 lanes -> contiguous vreg copies.
    cd = wout_ref.dtype
    lhs = jnp.concatenate(
        [ff1.astype(cd), ff2.astype(cd), (ff1 * ff2).astype(cd)], axis=-1)
    logit = jnp.dot(lhs, wout_ref[...],
                    preferred_element_type=jnp.float32) + bout_ref[...]
    out_ref[...] = logit.astype(out_ref.dtype)


# --------------------------- wrapper / weight prep ----------------------------

def prepare_dmf_params(params, *, compute_dtype=jnp.bfloat16):
    """One-time weight prep (transpose / merge / pad / cast).

    Hoisted out of the per-call path so the forward pass does no per-call XLA
    passes over the weights.
    """
    F = params["w11_0"].shape[0]
    classes = params["w21"].shape[0]
    F_pad = _round_up(F, _LANE)
    C_pad = _round_up(classes, _LANE)

    def pad_cols(w, total):
        return jnp.pad(w, ((0, 0), (0, total - w.shape[1])))

    def pad_rows(w, total):
        return jnp.pad(w, ((0, total - w.shape[0]), (0, 0)))

    # Hidden branches: [in, 2*F_pad]; each expert block padded to F_pad lanes.
    w11 = jnp.concatenate([pad_cols(params["w11_0"].T, F_pad),
                           pad_cols(params["w11_1"].T, F_pad)], axis=1)
    w12 = jnp.concatenate([pad_cols(params["w12_0"].T, F_pad),
                           pad_cols(params["w12_1"].T, F_pad)], axis=1)
    b11 = jnp.concatenate([jnp.pad(params["b11_0"], (0, F_pad - F)),
                           jnp.pad(params["b11_1"], (0, F_pad - F))])[None, :]
    b12 = jnp.concatenate([jnp.pad(params["b12_0"], (0, F_pad - F)),
                           jnp.pad(params["b12_1"], (0, F_pad - F))])[None, :]

    # Output: gamma21(cat(ff1, ff2)) + gamma22(ff1*ff2)
    #      == [ff1 | ff2 | ff1*ff2] @ [W21a ; W21b ; W22] + b21,
    # each F-row block padded to F_pad rows, classes padded to C_pad lanes.
    w21 = params["w21"]                                      # [classes, 2F]
    wout = jnp.concatenate([pad_rows(w21[:, :F].T, F_pad),
                            pad_rows(w21[:, F:].T, F_pad),
                            pad_rows(params["w22"].T, F_pad)], axis=0)
    wout = pad_cols(wout, C_pad)                             # [3*F_pad, C_pad]
    bout = jnp.pad(params["b21"], (0, C_pad - classes))[None, :]

    return {
        "w11": w11.astype(compute_dtype), "b11": b11.astype(jnp.float32),
        "w12": w12.astype(compute_dtype), "b12": b12.astype(jnp.float32),
        "wout": wout.astype(compute_dtype), "bout": bout.astype(jnp.float32),
        "F": F, "F_pad": F_pad, "classes": classes, "C_pad": C_pad,
        "in_features": params["w11_0"].shape[1],
        "compute_dtype": compute_dtype,
    }


def _vmem_budget_bytes():
    """Generation-aware VMEM cap: ~52 MiB on v7x (64 MiB physical/TC),
    ~110 MiB on v5e/v6e (128 MiB physical). Conservative fallback if the
    hardware query is unavailable."""
    try:
        cap = getattr(pltpu.get_tpu_info(), "vmem_capacity_bytes", 0)
    except Exception:
        cap = 0
    if not cap:
        return 48 * 1024 * 1024
    if cap >= 100 * 1024 * 1024:          # v5e / v6e
        return 110 * 1024 * 1024
    return 52 * 1024 * 1024               # v7x


def _pick_tile_n(N, in_features, F_pad, C_pad, out_dtype,
                 vmem_budget, weights_bytes, tile_n):
    """Clamp the batch tile to the VMEM budget and ensure >=2 grid steps."""
    bf16, f32 = 2, 4
    in_pad = _round_up(in_features, _LANE)
    out_b = jnp.dtype(out_dtype).itemsize
    # Streamed tiles (x1, x2, d, out) are double-buffered; intermediates
    # (h1, h2, ff1, ff2, ff1*ff2, lhs, f32 accumulator) live once.
    io_per_row = 2 * (2 * in_pad * bf16 + _LANE * f32 + C_pad * out_b)
    live_per_row = (2 * (2 * F_pad) * f32 + 3 * F_pad * f32
                    + 3 * F_pad * bf16 + C_pad * f32)
    per_row = io_per_row + live_per_row
    margin = 6 * 1024 * 1024              # compiler-internal scratch headroom
    cap = max(_SUBLANE, (vmem_budget - weights_bytes - margin) // per_row)

    tile_n = int(min(tile_n, cap, _round_up(N, _SUBLANE)))
    tile_n = max(_SUBLANE, (tile_n // _SUBLANE) * _SUBLANE)
    # v7x megacore: make sure the 1-D "parallel" grid has >= 2 steps when the
    # batch allows, so both TensorCores get work.
    if N > _SUBLANE and _round_up(N, tile_n) // tile_n < 2:
        tile_n = max(_SUBLANE, _round_up((N + 1) // 2, _SUBLANE))
    return tile_n


def dmf_forward(x1, x2, distance, prepped, *, tile_n=1024,
                out_dtype=jnp.bfloat16):
    N, in_features = x1.shape
    assert in_features == prepped["in_features"]
    F_pad, C_pad = prepped["F_pad"], prepped["C_pad"]
    classes = prepped["classes"]
    compute_dtype = prepped["compute_dtype"]

    w11, b11 = prepped["w11"], prepped["b11"]
    w12, b12 = prepped["w12"], prepped["b12"]
    wout, bout = prepped["wout"], prepped["bout"]

    weights_bytes = sum(int(a.size) * a.dtype.itemsize
                        for a in (w11, b11, w12, b12, wout, bout))
    vmem_budget = _vmem_budget_bytes()
    tile_n = _pick_tile_n(N, in_features, F_pad, C_pad, out_dtype,
                          vmem_budget, weights_bytes, tile_n)

    N_pad = _round_up(N, tile_n)
    pad = N_pad - N
    x1p = jnp.pad(x1, ((0, pad), (0, 0))).astype(compute_dtype)
    x2p = jnp.pad(x2, ((0, pad), (0, 0))).astype(compute_dtype)
    dp = jnp.pad(distance.reshape(N, 1).astype(jnp.float32), ((0, pad), (0, 0)))

    # Batch-tiled streamed operands (default double-buffered pipeline).
    row_spec = lambda shape: pl.BlockSpec(shape, lambda i: (i, 0))
    # Weights/biases: constant index_map (fetched once); Buffered(1) keeps a
    # single VMEM copy instead of the default two.
    rep_spec = lambda shape: pl.BlockSpec(shape, lambda i: (0, 0),
                                          pipeline_mode=pl.Buffered(1))

    out = pl.pallas_call(
        functools.partial(dmf_kernel, F_pad=F_pad),
        out_shape=jax.ShapeDtypeStruct((N_pad, C_pad), out_dtype),
        grid_spec=pltpu.PrefetchScalarGridSpec(
            num_scalar_prefetch=0,
            grid=(N_pad // tile_n,),
            in_specs=[
                row_spec((tile_n, in_features)),            # x1
                row_spec((tile_n, in_features)),            # x2
                row_spec((tile_n, 1)),                      # distance
                rep_spec((in_features, 2 * F_pad)),         # w11 (merged, padded)
                rep_spec((1, 2 * F_pad)),                   # b11
                rep_spec((in_features, 2 * F_pad)),         # w12
                rep_spec((1, 2 * F_pad)),                   # b12
                rep_spec((3 * F_pad, C_pad)),               # wout (fused, padded)
                rep_spec((1, C_pad)),                       # bout
            ],
            out_specs=row_spec((tile_n, C_pad)),
        ),
        compiler_params=pltpu.CompilerParams(
            dimension_semantics=("parallel",),              # megacore split (v7x)
            vmem_limit_bytes=vmem_budget,
        ),
    )(x1p, x2p, dp, w11, b11, w12, b12, wout, bout)

    # Production callers that can consume padded bf16 logits directly should
    # skip this slice to avoid re-streaming the padded output.
    return out[:N, :classes]


# ------------------------------- test harness --------------------------------

def xavier_normal(key, shape):
    # shape = (out_features, in_features), PyTorch convention
    fan_out, fan_in = shape
    std = (2.0 / (fan_in + fan_out)) ** 0.5
    return std * jax.random.normal(key, shape, dtype=jnp.float32)


def init_params(key, in_features, out_features, classes):
    ks = jax.random.split(key, 6)
    return {
        "w11_0": xavier_normal(ks[0], (out_features, in_features)),
        "b11_0": jnp.zeros((out_features,), jnp.float32),
        "w11_1": xavier_normal(ks[1], (out_features, in_features)),
        "b11_1": jnp.zeros((out_features,), jnp.float32),
        "w12_0": xavier_normal(ks[2], (out_features, in_features)),
        "b12_0": jnp.zeros((out_features,), jnp.float32),
        "w12_1": xavier_normal(ks[3], (out_features, in_features)),
        "b12_1": jnp.zeros((out_features,), jnp.float32),
        "w21":   xavier_normal(ks[4], (classes, 2 * out_features)),
        "b21":   jnp.zeros((classes,), jnp.float32),
        "w22":   xavier_normal(ks[5], (classes, out_features)),
    }


def dmf_reference(x1, x2, distance, p):
    # Pure-JAX f32 reference of the PyTorch forward.
    d = distance.reshape(-1, 1)
    lin = lambda x, w, b: x @ w.T + b
    ff1 = jax.nn.relu(d * lin(x1, p["w11_0"], p["b11_0"])
                      + (1 - d) * lin(x1, p["w11_1"], p["b11_1"]))
    ff2 = jax.nn.relu(d * lin(x2, p["w12_0"], p["b12_0"])
                      + (1 - d) * lin(x2, p["w12_1"], p["b12_1"]))
    cat = jnp.concatenate([ff1, ff2], axis=1)
    return cat @ p["w21"].T + p["b21"] + (ff1 * ff2) @ p["w22"].T


if __name__ == "__main__":
    in_features, out_features, classes, batch = 32, 32, 8, 8

    key = jax.random.PRNGKey(0)
    kp, k1, k2, kd = jax.random.split(key, 4)
    params = init_params(kp, in_features, out_features, classes)

    x1 = jax.random.normal(k1, (batch, in_features), dtype=jnp.float32)
    x2 = jax.random.normal(k2, (batch, in_features), dtype=jnp.float32)
    distance = jax.random.uniform(kd, (batch, 1), dtype=jnp.float32)

    prepped = prepare_dmf_params(params)          # one-time weight prep
    out = dmf_forward(x1, x2, distance, prepped)
    jax.block_until_ready(out)

    ref = dmf_reference(x1, x2, distance, params)
    assert out.shape == (batch, classes)
    # Tolerance relaxed vs pure-f32 because matmul operands and the stored
    # logits are bf16 (matmuls still accumulate in f32 on the MXU).
    out_f32 = jnp.asarray(out, jnp.float32)
    assert jnp.allclose(out_f32, ref, atol=1.5e-1, rtol=1.0e-1), float(
        jnp.max(jnp.abs(out_f32 - ref)))

    print("KERNEL_OK")
</pallas_src>

<mosaic_0001>
module attributes {stable_mosaic.version = 11 : i64} {
  func.func @dmf_kernel(%arg0: i32, %arg1: memref<8x32xbf16, #tpu.memory_space<vmem>>, %arg2: memref<8x32xbf16, #tpu.memory_space<vmem>>, %arg3: memref<8x1xf32, #tpu.memory_space<vmem>>, %arg4: memref<32x256xbf16, #tpu.memory_space<vmem>>, %arg5: memref<1x256xf32, #tpu.memory_space<vmem>>, %arg6: memref<32x256xbf16, #tpu.memory_space<vmem>>, %arg7: memref<1x256xf32, #tpu.memory_space<vmem>>, %arg8: memref<384x128xbf16, #tpu.memory_space<vmem>>, %arg9: memref<1x128xf32, #tpu.memory_space<vmem>>, %arg10: memref<8x128xbf16, #tpu.memory_space<vmem>>) attributes {dimension_semantics = [#tpu.dimension_semantics<parallel>], iteration_bounds = array<i64: 1>, scalar_prefetch = 0 : i64, scratch_operands = 0 : i64, tpu.core_type = #tpu.core_type<tc>, window_params = [{transform_indices = @transform_0, window_bounds = array<i64: 8, 32>}, {transform_indices = @transform_1, window_bounds = array<i64: 8, 32>}, {transform_indices = @transform_2, window_bounds = array<i64: 8, 1>}, {pipeline_mode = #tpu.pipeline_mode<synchronous>, transform_indices = @transform_3, window_bounds = array<i64: 32, 256>}, {pipeline_mode = #tpu.pipeline_mode<synchronous>, transform_indices = @transform_4, window_bounds = array<i64: 1, 256>}, {pipeline_mode = #tpu.pipeline_mode<synchronous>, transform_indices = @transform_5, window_bounds = array<i64: 32, 256>}, {pipeline_mode = #tpu.pipeline_mode<synchronous>, transform_indices = @transform_6, window_bounds = array<i64: 1, 256>}, {pipeline_mode = #tpu.pipeline_mode<synchronous>, transform_indices = @transform_7, window_bounds = array<i64: 384, 128>}, {pipeline_mode = #tpu.pipeline_mode<synchronous>, transform_indices = @transform_8, window_bounds = array<i64: 1, 128>}, {transform_indices = @transform_9, window_bounds = array<i64: 8, 128>}]} {
    %c0 = arith.constant 0 : index
    %c0_0 = arith.constant 0 : index
    %0 = vector.load %arg3[%c0, %c0_0] : memref<8x1xf32, #tpu.memory_space<vmem>>, vector<8x1xf32>
    %1 = vector.shape_cast %0 : vector<8x1xf32> to vector<8x1xf32>
    %2 = vector.broadcast %1 : vector<8x1xf32> to vector<8x128xf32>
    %c0_1 = arith.constant 0 : index
    %c0_2 = arith.constant 0 : index
    %3 = vector.load %arg1[%c0_1, %c0_2] : memref<8x32xbf16, #tpu.memory_space<vmem>>, vector<8x32xbf16>
    %c0_3 = arith.constant 0 : index
    %c0_4 = arith.constant 0 : index
    %4 = vector.load %arg4[%c0_3, %c0_4] : memref<32x256xbf16, #tpu.memory_space<vmem>>, vector<32x256xbf16>
    %cst = arith.constant dense<0.000000e+00> : vector<8x256xf32>
    %5 = tpu.matmul %3, %4, %cst {dimension_numbers = #tpu.dot_dimension_numbers<[1], [0], [0], [1], [0, 0, 1, 1], [], []>} : vector<8x32xbf16>, vector<32x256xbf16>, vector<8x256xf32> -> vector<8x256xf32>
    %c0_5 = arith.constant 0 : index
    %c0_6 = arith.constant 0 : index
    %6 = vector.load %arg5[%c0_5, %c0_6] : memref<1x256xf32, #tpu.memory_space<vmem>>, vector<1x256xf32>
    %7 = vector.broadcast %6 : vector<1x256xf32> to vector<8x256xf32>
    %8 = arith.addf %5, %7 : vector<8x256xf32>
    %9 = vector.extract_strided_slice %8 {offsets = [0, 0], sizes = [8, 128], strides = [1, 1]} : vector<8x256xf32> to vector<8x128xf32>
    %10 = vector.extract_strided_slice %8 {offsets = [0, 128], sizes = [8, 128], strides = [1, 1]} : vector<8x256xf32> to vector<8x128xf32>
    %11 = arith.subf %9, %10 : vector<8x128xf32>
    %12 = arith.mulf %2, %11 : vector<8x128xf32>
    %13 = arith.addf %10, %12 : vector<8x128xf32>
    %cst_7 = arith.constant 0.000000e+00 : f32
    %14 = vector.broadcast %cst_7 : f32 to vector<8x128xf32>
    %15 = arith.maximumf %13, %14 : vector<8x128xf32>
    %c0_8 = arith.constant 0 : index
    %c0_9 = arith.constant 0 : index
    %16 = vector.load %arg2[%c0_8, %c0_9] : memref<8x32xbf16, #tpu.memory_space<vmem>>, vector<8x32xbf16>
    %c0_10 = arith.constant 0 : index
    %c0_11 = arith.constant 0 : index
    %17 = vector.load %arg6[%c0_10, %c0_11] : memref<32x256xbf16, #tpu.memory_space<vmem>>, vector<32x256xbf16>
    %cst_12 = arith.constant dense<0.000000e+00> : vector<8x256xf32>
    %18 = tpu.matmul %16, %17, %cst_12 {dimension_numbers = #tpu.dot_dimension_numbers<[1], [0], [0], [1], [0, 0, 1, 1], [], []>} : vector<8x32xbf16>, vector<32x256xbf16>, vector<8x256xf32> -> vector<8x256xf32>
    %c0_13 = arith.constant 0 : index
    %c0_14 = arith.constant 0 : index
    %19 = vector.load %arg7[%c0_13, %c0_14] : memref<1x256xf32, #tpu.memory_space<vmem>>, vector<1x256xf32>
    %20 = vector.broadcast %19 : vector<1x256xf32> to vector<8x256xf32>
    %21 = arith.addf %18, %20 : vector<8x256xf32>
    %22 = vector.extract_strided_slice %21 {offsets = [0, 0], sizes = [8, 128], strides = [1, 1]} : vector<8x256xf32> to vector<8x128xf32>
    %23 = vector.extract_strided_slice %21 {offsets = [0, 128], sizes = [8, 128], strides = [1, 1]} : vector<8x256xf32> to vector<8x128xf32>
    %24 = arith.subf %22, %23 : vector<8x128xf32>
    %25 = arith.mulf %2, %24 : vector<8x128xf32>
    %26 = arith.addf %23, %25 : vector<8x128xf32>
    %cst_15 = arith.constant 0.000000e+00 : f32
    %27 = vector.broadcast %cst_15 : f32 to vector<8x128xf32>
    %28 = arith.maximumf %26, %27 : vector<8x128xf32>
    %29 = arith.truncf %15 : vector<8x128xf32> to vector<8x128xbf16>
    %30 = arith.truncf %28 : vector<8x128xf32> to vector<8x128xbf16>
    %31 = arith.mulf %15, %28 : vector<8x128xf32>
    %32 = arith.truncf %31 : vector<8x128xf32> to vector<8x128xbf16>
    %33 = tpu.concatenate %29, %30, %32 in 1 : vector<8x128xbf16>, vector<8x128xbf16>, vector<8x128xbf16> -> vector<8x384xbf16>
    %c0_16 = arith.constant 0 : index
    %c0_17 = arith.constant 0 : index
    %34 = vector.load %arg8[%c0_16, %c0_17] : memref<384x128xbf16, #tpu.memory_space<vmem>>, vector<384x128xbf16>
    %cst_18 = arith.constant dense<0.000000e+00> : vector<8x128xf32>
    %35 = tpu.matmul %33, %34, %cst_18 {dimension_numbers = #tpu.dot_dimension_numbers<[1], [0], [0], [1], [0, 0, 1, 1], [], []>} : vector<8x384xbf16>, vector<384x128xbf16>, vector<8x128xf32> -> vector<8x128xf32>
    %c0_19 = arith.constant 0 : index
    %c0_20 = arith.constant 0 : index
    %36 = vector.load %arg9[%c0_19, %c0_20] : memref<1x128xf32, #tpu.memory_space<vmem>>, vector<1x128xf32>
    %37 = vector.broadcast %36 : vector<1x128xf32> to vector<8x128xf32>
    %38 = arith.addf %35, %37 : vector<8x128xf32>
    %39 = arith.truncf %38 : vector<8x128xf32> to vector<8x128xbf16>
    %c0_21 = arith.constant 0 : index
    %c0_22 = arith.constant 0 : index
    %40 = vector.load %arg10[%c0_21, %c0_22] : memref<8x128xbf16, #tpu.memory_space<vmem>>, vector<8x128xbf16>
    tpu.vector_store %arg10[%c0_21, %c0_22], %39 {strides = array<i32>} : memref<8x128xbf16, #tpu.memory_space<vmem>>, vector<8x128xbf16>,
    return
  }
  func.func @transform_0(%arg0: i32) -> (i32, i32) {
    %c0_i32 = arith.constant 0 : i32
    %c0_i32_0 = arith.constant 0 : i32
    return %arg0, %c0_i32 : i32, i32
  }
  func.func @transform_1(%arg0: i32) -> (i32, i32) {
    %c0_i32 = arith.constant 0 : i32
    %c0_i32_0 = arith.constant 0 : i32
    return %arg0, %c0_i32 : i32, i32
  }
  func.func @transform_2(%arg0: i32) -> (i32, i32) {
    %c0_i32 = arith.constant 0 : i32
    %c0_i32_0 = arith.constant 0 : i32
    return %arg0, %c0_i32 : i32, i32
  }
  func.func @transform_3(%arg0: i32) -> (i32, i32) {
    %c0_i32 = arith.constant 0 : i32
    %c0_i32_0 = arith.constant 0 : i32
    %c0_i32_1 = arith.constant 0 : i32
    return %c0_i32, %c0_i32_0 : i32, i32
  }
  func.func @transform_4(%arg0: i32) -> (i32, i32) {
    %c0_i32 = arith.constant 0 : i32
    %c0_i32_0 = arith.constant 0 : i32
    %c0_i32_1 = arith.constant 0 : i32
    return %c0_i32, %c0_i32_0 : i32, i32
  }
  func.func @transform_5(%arg0: i32) -> (i32, i32) {
    %c0_i32 = arith.constant 0 : i32
    %c0_i32_0 = arith.constant 0 : i32
    %c0_i32_1 = arith.constant 0 : i32
    return %c0_i32, %c0_i32_0 : i32, i32
  }
  func.func @transform_6(%arg0: i32) -> (i32, i32) {
    %c0_i32 = arith.constant 0 : i32
    %c0_i32_0 = arith.constant 0 : i32
    %c0_i32_1 = arith.constant 0 : i32
    return %c0_i32, %c0_i32_0 : i32, i32
  }
  func.func @transform_7(%arg0: i32) -> (i32, i32) {
    %c0_i32 = arith.constant 0 : i32
    %c0_i32_0 = arith.constant 0 : i32
    %c0_i32_1 = arith.constant 0 : i32
    return %c0_i32, %c0_i32_0 : i32, i32
  }
  func.func @transform_8(%arg0: i32) -> (i32, i32) {
    %c0_i32 = arith.constant 0 : i32
    %c0_i32_0 = arith.constant 0 : i32
    %c0_i32_1 = arith.constant 0 : i32
    return %c0_i32, %c0_i32_0 : i32, i32
  }
  func.func @transform_9(%arg0: i32) -> (i32, i32) {
    %c0_i32 = arith.constant 0 : i32
    %c0_i32_0 = arith.constant 0 : i32
    return %arg0, %c0_i32 : i32, i32
  }
}

</mosaic_0001>

<llo_original>
// kernel: tpu_custom_call.1
$region0: #{tpu_custom_call.1}
  #allocation0 [shape = 'u32[]', space=smem, size = 0x4, offset = 0x4, fixed_abs, tag = 'smem constant byte address 0x4 - core index']
  #allocation1 [shape = 'u32[144,128]{1,0:T(1,128)}', space=vmem, size = 0x12000, scoped, tag = 'internal scratch']
  %s0 = inlined_call_operand.vmem [shape: bf16[8,32], index: 0, kind: input, shape index: {}]
  %s1 = inlined_call_operand.vmem [shape: bf16[8,32], index: 1, kind: input, shape index: {}]
  %s2 = inlined_call_operand.vmem [shape: f32[8,1], index: 2, kind: input, shape index: {}]
  %s3 = inlined_call_operand.hbm [shape: bf16[32,256], index: 3, kind: input, shape index: {}]
  %s4 = inlined_call_operand.vmem [shape: f32[1,256], index: 4, kind: input, shape index: {}]
  %s5 = inlined_call_operand.hbm [shape: bf16[32,256], index: 5, kind: input, shape index: {}]
  %s6 = inlined_call_operand.vmem [shape: f32[1,256], index: 6, kind: input, shape index: {}]
  %s7 = inlined_call_operand.hbm [shape: bf16[384,128], index: 7, kind: input, shape index: {}]
  %s8 = inlined_call_operand.vmem [shape: f32[1,128], index: 8, kind: input, shape index: {}]
  %s9 = inlined_call_operand.hbm [shape: bf16[8,128], index: 9, kind: output, shape index: {}]
  %s10 = sld [smem:[#allocation0]]
  $region58: #{tpu_custom_call.1} parent=0
    _
  %s12 = ssub.s32 1, %s10
  %s13 = scalar_select 0, %s12, %s10
  $region1: #{tpu_custom_call.1} parent=0
    #allocation2 [shape = 'u8[16384]{0}', space=vmem, size = 0x4000, scoped, tag = 'input window, operand 3, single buffered']
    #allocation3 [shape = 's32[1]{0}', space=sflag, size = 0x4, scoped, tag = 'scoped memory for tpu_custom_call.1']
    #allocation4 [shape = 's32[1]{0}', space=sflag, size = 0x4, scoped, tag = 'scoped memory for tpu_custom_call.1']
    #allocation5 [shape = 'u8[16384]{0}', space=vmem, size = 0x4000, scoped, tag = 'input window, operand 5, single buffered']
    #allocation6 [shape = 's32[1]{0}', space=sflag, size = 0x4, scoped, tag = 'scoped memory for tpu_custom_call.1']
    #allocation7 [shape = 'u8[98304]{0}', space=vmem, size = 0x18000, scoped, tag = 'input window, operand 7, single buffered']
    #allocation8 [shape = 'u8[2048]{0}', space=vmem, size = 0x800, scoped, tag = 'output window, operand 0, single buffered']
    %14 = vsyncpa [#allocation3], 0
    %15 = vsyncpa [#allocation6], 0
    %16 = vsyncpa [#allocation4], 0
    // Predicated region
    $region2: #{tpu_custom_call.1} parent=1 // pred_check
      _
    $region3: #{tpu_custom_call.1} parent=1 // pred_check_branch
      %18 = sbr.rel (0) target = $region5
    $region4: #{tpu_custom_call.1} parent=1 // pred_region
      _
    $region5: #{tpu_custom_call.1} parent=1 // pred_fallthru
      _
    // Predicated region
    $region6: #{tpu_custom_call.1} parent=1 // pred_check
      _
    $region7: #{tpu_custom_call.1} parent=1 // pred_check_branch
      %20 = sbr.rel (0) target = $region9
    $region8: #{tpu_custom_call.1} parent=1 // pred_region
      _
    $region9: #{tpu_custom_call.1} parent=1 // pred_fallthru
      _
    // Predicated region
    $region10: #{tpu_custom_call.1} parent=1 // pred_check
      _
    $region11: #{tpu_custom_call.1} parent=1 // pred_check_branch
      %22 = sbr.rel (0) target = $region13
    $region12: #{tpu_custom_call.1} parent=1 // pred_region
      _
    $region13: #{tpu_custom_call.1} parent=1 // pred_fallthru
      _
    // Predicated region
    $region14: #{tpu_custom_call.1} parent=1 // pred_check
      _
    $region15: #{tpu_custom_call.1} parent=1 // pred_check_branch
      %24 = sbr.rel (0) target = $region17
    $region16: #{tpu_custom_call.1} parent=1 // pred_region
      %s26 = ssub.s32 512, 512
      %27 = vsyncadd [#allocation3], %s26
      %s28 = sshll.u32 [#allocation2], 4
      %s29 = int_to_ptr.vmem [resolvable:$true] %s28
      %34 = dma.hbm_to_vmem [thread:$0]  %s3, 512, %s29, [#allocation3], 128, 128, 8
    $region17: #{tpu_custom_call.1} parent=1 // pred_fallthru
      _
    // Predicated region
    $region18: #{tpu_custom_call.1} parent=1 // pred_check
      _
    $region19: #{tpu_custom_call.1} parent=1 // pred_check_branch
      %36 = sbr.rel (0) target = $region21
    $region20: #{tpu_custom_call.1} parent=1 // pred_region
      _
    $region21: #{tpu_custom_call.1} parent=1 // pred_fallthru
      _
    // Predicated region
    $region22: #{tpu_custom_call.1} parent=1 // pred_check
      _
    $region23: #{tpu_custom_call.1} parent=1 // pred_check_branch
      %38 = sbr.rel (0) target = $region25
    $region24: #{tpu_custom_call.1} parent=1 // pred_region
      %s40 = ssub.s32 512, 512
      %41 = vsyncadd [#allocation6], %s40
      %s42 = sshll.u32 [#allocation5], 4
      %s43 = int_to_ptr.vmem [resolvable:$true] %s42
      %48 = dma.hbm_to_vmem [thread:$0]  %s5, 512, %s43, [#allocation6], 128, 128, 8
    $region25: #{tpu_custom_call.1} parent=1 // pred_fallthru
      _
    // Predicated region
    $region26: #{tpu_custom_call.1} parent=1 // pred_check
      _
    $region27: #{tpu_custom_call.1} parent=1 // pred_check_branch
      %50 = sbr.rel (0) target = $region29
    $region28: #{tpu_custom_call.1} parent=1 // pred_region
      _
    $region29: #{tpu_custom_call.1} parent=1 // pred_fallthru
      _
    // Predicated region
    $region30: #{tpu_custom_call.1} parent=1 // pred_check
      _
    $region31: #{tpu_custom_call.1} parent=1 // pred_check_branch
      %52 = sbr.rel (0) target = $region33
    $region32: #{tpu_custom_call.1} parent=1 // pred_region
      %s54 = ssub.s32 3072, 3072
      %55 = vsyncadd [#allocation6], %s54
      %s56 = sshll.u32 [#allocation7], 4
      %s57 = int_to_ptr.vmem [resolvable:$true] %s56
      %62 = dma.hbm_to_vmem [thread:$0]  %s7, 3072, %s57, [#allocation6], 64, 64, 4
    $region33: #{tpu_custom_call.1} parent=1 // pred_fallthru
      _
    // Predicated region
    $region34: #{tpu_custom_call.1} parent=1 // pred_check
      _
    $region35: #{tpu_custom_call.1} parent=1 // pred_check_branch
      %64 = sbr.rel (0) target = $region37
    $region36: #{tpu_custom_call.1} parent=1 // pred_region
      _
    $region37: #{tpu_custom_call.1} parent=1 // pred_fallthru
      _
    // Predicated region
    $region38: #{tpu_custom_call.1} parent=1 // pred_check
      _
    $region39: #{tpu_custom_call.1} parent=1 // pred_check_branch
      %66 = sbr.rel (0) target = $region41
    $region40: #{tpu_custom_call.1} parent=1 // pred_region
      %67 = dma.done [#allocation3], 512
    $region41: #{tpu_custom_call.1} parent=1 // pred_fallthru
      _
    // Predicated region
    $region42: #{tpu_custom_call.1} parent=1 // pred_check
      _
    $region43: #{tpu_custom_call.1} parent=1 // pred_check_branch
      %69 = sbr.rel (0) target = $region45
    $region44: #{tpu_custom_call.1} parent=1 // pred_region
      %70 = dma.done [#allocation6], 512
    $region45: #{tpu_custom_call.1} parent=1 // pred_fallthru
      _
    // Predicated region
    $region46: #{tpu_custom_call.1} parent=1 // pred_check
      _
    $region47: #{tpu_custom_call.1} parent=1 // pred_check_branch
      %72 = sbr.rel (0) target = $region49
    $region48: #{tpu_custom_call.1} parent=1 // pred_region
      %73 = dma.done [#allocation6], 3072
    $region49: #{tpu_custom_call.1} parent=1 // pred_fallthru
      _
    %v75 = vld [vmem:[%s2] sm:$0xff]
    %77 = vset.pattern.permute.xlu0 0
    %78 = vperm.xlu0 %77, %v75
    %v79 = vpop.permute.xlu0 %78
    %v81 = vld [vmem:[%s0] sm:$0xf]
    %v82 = vld [vmem:[#allocation2] sm:$0xff]
    %v83 = vld [vmem:[#allocation2 + $0x8] sm:$0xff]
    %v84 = vld [vmem:[#allocation2 + $0x10] sm:$0xff]
    %v85 = vld [vmem:[#allocation2 + $0x18] sm:$0xff]
    %v86 = vld [vmem:[%s4] sm:$0x3]
    %v88 = vlaneseq
    %v89 = vshrl.u32 %v88, 7
    %v90 = vsub.s32 0, %v89
    %v91 = vrot.slane %v86, %v90
    %v92 = vlaneseq
    %v93 = vshrl.u32 %v92, 7
    %v94 = vsub.s32 1, %v93
    %v95 = vrot.slane %v86, %v94
    %v102 = vunpack.c.l.b16 %v82
    %v103 = vunpack.c.h.b16 %v82
    %v104 = vunpack.c.l.b16 %v83
    %v105 = vunpack.c.h.b16 %v83
    %v106 = vunpack.c.l.b16 %v84
    %v107 = vunpack.c.h.b16 %v84
    %v108 = vunpack.c.l.b16 %v85
    %v109 = vunpack.c.h.b16 %v85
    %v110 = vpack.c.b16 %v104, %v102
    %v111 = vpack.c.b16 %v105, %v103
    %v112 = vpack.c.b16 %v108, %v106
    %v113 = vpack.c.b16 %v109, %v107
    %vm118 = vcmask 261120
    %v120 = vsel %vm118, %v81, 0
    %122 = vmatprep.subr.bf16.mxu0 0
    %123 = vmatpush1.bf16.msra.mxu0 0
    %124 = vmatprep.subr.bf16.mxu0 0
    %125 = vmatpush1.bf16.msra.mxu0 0
    %126 = vmatprep.subr.bf16.mxu0 0
    %127 = vmatpush1.bf16.msra.mxu0 0
    %128 = vmatprep.subr.bf16.mxu0 0
    %129 = vmatpush1.bf16.msra.mxu0 0
    %130 = vmatprep.subr.bf16.mxu0 0
    %131 = vmatpush1.bf16.msra.mxu0 0
    %132 = vmatprep.subr.bf16.mxu0 0
    %133 = vmatpush1.bf16.msra.mxu0 0
    %134 = vmatprep.subr.bf16.mxu0 %v113
    %135 = vmatpush1.bf16.msra.mxu0 %v112
    %136 = vmatprep.subr.bf16.mxu0 %v111
    %137 = vmatpush1.bf16.msra.mxu0 %v110
    %138 = vmatprep.subr.bf16.mxu0 0
    %139 = vmatpush2.bf16.msra.mxu0 0
    %140 = vmatprep.subr.bf16.mxu0 0
    %141 = vmatpush2.bf16.msra.mxu0 0
    %142 = vmatprep.subr.bf16.mxu0 0
    %143 = vmatpush2.bf16.msra.mxu0 0
    %144 = vmatprep.subr.bf16.mxu0 0
    %145 = vmatpush2.bf16.msra.mxu0 0
    %146 = vmatprep.subr.bf16.mxu0 0
    %147 = vmatpush2.bf16.msra.mxu0 0
    %148 = vmatprep.subr.bf16.mxu0 0
    %149 = vmatpush2.bf16.msra.mxu0 0
    %150 = vmatprep.subr.bf16.mxu0 0
    %151 = vmatpush2.bf16.msra.mxu0 0
    %152 = vmatprep.subr.bf16.mxu0 0
    %153 = vmatpush2.bf16.msra.mxu0 0
    %154 = vmatprep.mubr.bf16.mxu0 0
    %155 = vmatmul.mubr.bf16.gmra.mxu0 %v120
    %v156 = vpop.f32.mrf.mxu0
    %v157 = vadd.f32 %v91, %v156
    %v158 = vpop.f32.mrf.mxu0
    %v159 = vadd.f32 %v95, %v158
    %v160 = vpop.f32.mrf.mxu0
    %v161 = vpop.f32.mrf.mxu0
    %162 = vdwg.mxu0
    %v163 = vsub.f32 %v157, %v159
    %v164 = vmul.f32 %v79, %v163
    %v165 = vadd.f32 %v159, %v164
    %v166 = vmax.f32 %v165, 0.0
    %v167 = vld [vmem:[%s1] sm:$0xf]
    %v168 = vld [vmem:[#allocation5] sm:$0xff]
    %v169 = vld [vmem:[#allocation5 + $0x8] sm:$0xff]
    %v170 = vld [vmem:[#allocation5 + $0x10] sm:$0xff]
    %v171 = vld [vmem:[#allocation5 + $0x18] sm:$0xff]
    %v172 = vld [vmem:[%s6] sm:$0x3]
    %v174 = vlaneseq
    %v175 = vshrl.u32 %v174, 7
    %v176 = vsub.s32 0, %v175
    %v177 = vrot.slane %v172, %v176
    %v178 = vlaneseq
    %v179 = vshrl.u32 %v178, 7
    %v180 = vsub.s32 1, %v179
    %v181 = vrot.slane %v172, %v180
    %v188 = vunpack.c.l.b16 %v168
    %v189 = vunpack.c.h.b16 %v168
    %v190 = vunpack.c.l.b16 %v169
    %v191 = vunpack.c.h.b16 %v169
    %v192 = vunpack.c.l.b16 %v170
    %v193 = vunpack.c.h.b16 %v170
    %v194 = vunpack.c.l.b16 %v171
    %v195 = vunpack.c.h.b16 %v171
    %v196 = vpack.c.b16 %v190, %v188
    %v197 = vpack.c.b16 %v191, %v189
    %v198 = vpack.c.b16 %v194, %v192
    %v199 = vpack.c.b16 %v195, %v193
    %v205 = vsel %vm118, %v167, 0
    %207 = vmatprep.subr.bf16.mxu0 0
    %208 = vmatpush1.bf16.msra.mxu0 0
    %209 = vmatprep.subr.bf16.mxu0 0
    %210 = vmatpush1.bf16.msra.mxu0 0
    %211 = vmatprep.subr.bf16.mxu0 0
    %212 = vmatpush1.bf16.msra.mxu0 0
    %213 = vmatprep.subr.bf16.mxu0 0
    %214 = vmatpush1.bf16.msra.mxu0 0
    %215 = vmatprep.subr.bf16.mxu0 0
    %216 = vmatpush1.bf16.msra.mxu0 0
    %217 = vmatprep.subr.bf16.mxu0 0
    %218 = vmatpush1.bf16.msra.mxu0 0
    %219 = vmatprep.subr.bf16.mxu0 %v199
    %220 = vmatpush1.bf16.msra.mxu0 %v198
    %221 = vmatprep.subr.bf16.mxu0 %v197
    %222 = vmatpush1.bf16.msra.mxu0 %v196
    %223 = vmatprep.subr.bf16.mxu0 0
    %224 = vmatpush2.bf16.msra.mxu0 0
    %225 = vmatprep.subr.bf16.mxu0 0
    %226 = vmatpush2.bf16.msra.mxu0 0
    %227 = vmatprep.subr.bf16.mxu0 0
    %228 = vmatpush2.bf16.msra.mxu0 0
    %229 = vmatprep.subr.bf16.mxu0 0
    %230 = vmatpush2.bf16.msra.mxu0 0
    %231 = vmatprep.subr.bf16.mxu0 0
    %232 = vmatpush2.bf16.msra.mxu0 0
    %233 = vmatprep.subr.bf16.mxu0 0
    %234 = vmatpush2.bf16.msra.mxu0 0
    %235 = vmatprep.subr.bf16.mxu0 0
    %236 = vmatpush2.bf16.msra.mxu0 0
    %237 = vmatprep.subr.bf16.mxu0 0
    %238 = vmatpush2.bf16.msra.mxu0 0
    %239 = vmatprep.mubr.bf16.mxu0 0
    %240 = vmatmul.mubr.bf16.gmra.mxu0 %v205
    %v241 = vpop.f32.mrf.mxu0
    %v242 = vadd.f32 %v177, %v241
    %v243 = vpop.f32.mrf.mxu0
    %v244 = vadd.f32 %v181, %v243
    %v245 = vpop.f32.mrf.mxu0
    %v246 = vpop.f32.mrf.mxu0
    %247 = vdwg.mxu0
    %v248 = vsub.f32 %v242, %v244
    %v249 = vmul.f32 %v79, %v248
    %v250 = vadd.f32 %v244, %v249
    %v251 = vmax.f32 %v250, 0.0
    %v252 = vpack.c.bf16 %v166, %v166
    %v253 = vpack.c.bf16 %v251, %v251
    %v254 = vmul.f32 %v166, %v251
    %v255 = vpack.c.bf16 %v254, %v254
    %v256 = vld [vmem:[#allocation7] sm:$0xf]
    %v257 = vld [vmem:[#allocation7 + $0x4] sm:$0xf]
    %v258 = vld [vmem:[#allocation7 + $0x8] sm:$0xf]
    %v259 = vld [vmem:[#allocation7 + $0xc] sm:$0xf]
    %v260 = vld [vmem:[#allocation7 + $0x10] sm:$0xf]
    %v261 = vld [vmem:[#allocation7 + $0x14] sm:$0xf]
    %v262 = vld [vmem:[#allocation7 + $0x18] sm:$0xf]
    %v263 = vld [vmem:[#allocation7 + $0x1c] sm:$0xf]
    %v264 = vld [vmem:[#allocation7 + $0x20] sm:$0xf]
    %v265 = vld [vmem:[#allocation7 + $0x24] sm:$0xf]
    %v266 = vld [vmem:[#allocation7 + $0x28] sm:$0xf]
    %v267 = vld [vmem:[#allocation7 + $0x2c] sm:$0xf]
    %v268 = vld [vmem:[#allocation7 + $0x30] sm:$0xf]
    %v269 = vld [vmem:[#allocation7 + $0x34] sm:$0xf]
    %v270 = vld [vmem:[#allocation7 + $0x38] sm:$0xf]
    %v271 = vld [vmem:[#allocation7 + $0x3c] sm:$0xf]
    %v272 = vld [vmem:[#allocation7 + $0x40] sm:$0xf]
    %v273 = vld [vmem:[#allocation7 + $0x44] sm:$0xf]
    %v274 = vld [vmem:[#allocation7 + $0x48] sm:$0xf]
    %v275 = vld [vmem:[#allocation7 + $0x4c] sm:$0xf]
    %v276 = vld [vmem:[#allocation7 + $0x50] sm:$0xf]
    %v277 = vld [vmem:[#allocation7 + $0x54] sm:$0xf]
    %v278 = vld [vmem:[#allocation7 + $0x58] sm:$0xf]
    %v279 = vld [vmem:[#allocation7 + $0x5c] sm:$0xf]
    %v280 = vld [vmem:[#allocation7 + $0x60] sm:$0xf]
    %v281 = vld [vmem:[#allocation7 + $0x64] sm:$0xf]
    %v282 = vld [vmem:[#allocation7 + $0x68] sm:$0xf]
    %v283 = vld [vmem:[#allocation7 + $0x6c] sm:$0xf]
    %v284 = vld [vmem:[#allocation7 + $0x70] sm:$0xf]
    %v285 = vld [vmem:[#allocation7 + $0x74] sm:$0xf]
    %v286 = vld [vmem:[#allocation7 + $0x78] sm:$0xf]
    %v287 = vld [vmem:[#allocation7 + $0x7c] sm:$0xf]
    %v288 = vld [vmem:[#allocation7 + $0x80] sm:$0xf]
    %v289 = vld [vmem:[#allocation7 + $0x84] sm:$0xf]
    %v290 = vld [vmem:[#allocation7 + $0x88] sm:$0xf]
    %v291 = vld [vmem:[#allocation7 + $0x8c] sm:$0xf]
    %v292 = vld [vmem:[#allocation7 + $0x90] sm:$0xf]
    %v293 = vld [vmem:[#allocation7 + $0x94] sm:$0xf]
    %v294 = vld [vmem:[#allocation7 + $0x98] sm:$0xf]
    %v295 = vld [vmem:[#allocation7 + $0x9c] sm:$0xf]
    %v296 = vld [vmem:[#allocation7 + $0xa0] sm:$0xf]
    %v297 = vld [vmem:[#allocation7 + $0xa4] sm:$0xf]
    %v298 = vld [vmem:[#allocation7 + $0xa8] sm:$0xf]
    %v299 = vld [vmem:[#allocation7 + $0xac] sm:$0xf]
    %v300 = vld [vmem:[#allocation7 + $0xb0] sm:$0xf]
    %v301 = vld [vmem:[#allocation7 + $0xb4] sm:$0xf]
    %v302 = vld [vmem:[#allocation7 + $0xb8] sm:$0xf]
    %v303 = vld [vmem:[#allocation7 + $0xbc] sm:$0xf]
    %v304 = vld [vmem:[%s8] sm:$0x1]
    %v306 = vlaneseq
    %v307 = vshrl.u32 %v306, 7
    %v308 = vsub.s32 0, %v307
    %v309 = vrot.slane %v304, %v308
    %v359 = vunpack.c.l.b16 %v256
    %v360 = vunpack.c.l.b16 %v257
    %v361 = vunpack.c.l.b16 %v258
    %v362 = vunpack.c.l.b16 %v259
    %v363 = vunpack.c.l.b16 %v260
    %v364 = vunpack.c.l.b16 %v261
    %v365 = vunpack.c.l.b16 %v262
    %v366 = vunpack.c.l.b16 %v263
    %v367 = vunpack.c.l.b16 %v264
    %v368 = vunpack.c.l.b16 %v265
    %v369 = vunpack.c.l.b16 %v266
    %v370 = vunpack.c.l.b16 %v267
    %v371 = vunpack.c.l.b16 %v268
    %v372 = vunpack.c.l.b16 %v269
    %v373 = vunpack.c.l.b16 %v270
    %v374 = vunpack.c.l.b16 %v271
    %v375 = vunpack.c.l.b16 %v272
    %v376 = vunpack.c.l.b16 %v273
    %v377 = vunpack.c.l.b16 %v274
    %v378 = vunpack.c.l.b16 %v275
    %v379 = vunpack.c.l.b16 %v276
    %v380 = vunpack.c.l.b16 %v277
    %v381 = vunpack.c.l.b16 %v278
    %v382 = vunpack.c.l.b16 %v279
    %v383 = vunpack.c.l.b16 %v280
    %v384 = vunpack.c.l.b16 %v281
    %v385 = vunpack.c.l.b16 %v282
    %v386 = vunpack.c.l.b16 %v283
    %v387 = vunpack.c.l.b16 %v284
    %v388 = vunpack.c.l.b16 %v285
    %v389 = vunpack.c.l.b16 %v286
    %v390 = vunpack.c.l.b16 %v287
    %v391 = vunpack.c.l.b16 %v288
    %v392 = vunpack.c.l.b16 %v289
    %v393 = vunpack.c.l.b16 %v290
    %v394 = vunpack.c.l.b16 %v291
    %v395 = vunpack.c.l.b16 %v292
    %v396 = vunpack.c.l.b16 %v293
    %v397 = vunpack.c.l.b16 %v294
    %v398 = vunpack.c.l.b16 %v295
    %v399 = vunpack.c.l.b16 %v296
    %v400 = vunpack.c.l.b16 %v297
    %v401 = vunpack.c.l.b16 %v298
    %v402 = vunpack.c.l.b16 %v299
    %v403 = vunpack.c.l.b16 %v300
    %v404 = vunpack.c.l.b16 %v301
    %v405 = vunpack.c.l.b16 %v302
    %v406 = vunpack.c.l.b16 %v303
    %v407 = vpack.c.b16 %v360, %v359
    %v408 = vpack.c.b16 %v362, %v361
    %v409 = vpack.c.b16 %v364, %v363
    %v410 = vpack.c.b16 %v366, %v365
    %v411 = vpack.c.b16 %v368, %v367
    %v412 = vpack.c.b16 %v370, %v369
    %v413 = vpack.c.b16 %v372, %v371
    %v414 = vpack.c.b16 %v374, %v373
    %v415 = vpack.c.b16 %v376, %v375
    %v416 = vpack.c.b16 %v378, %v377
    %v417 = vpack.c.b16 %v380, %v379
    %v418 = vpack.c.b16 %v382, %v381
    %v419 = vpack.c.b16 %v384, %v383
    %v420 = vpack.c.b16 %v386, %v385
    %v421 = vpack.c.b16 %v388, %v387
    %v422 = vpack.c.b16 %v390, %v389
    %v423 = vpack.c.b16 %v392, %v391
    %v424 = vpack.c.b16 %v394, %v393
    %v425 = vpack.c.b16 %v396, %v395
    %v426 = vpack.c.b16 %v398, %v397
    %v427 = vpack.c.b16 %v400, %v399
    %v428 = vpack.c.b16 %v402, %v401
    %v429 = vpack.c.b16 %v404, %v403
    %v430 = vpack.c.b16 %v406, %v405
    %455 = vmatprep.subr.bf16.mxu0 0
    %456 = vmatpush1.bf16.msra.mxu0 %v414
    %457 = vmatprep.subr.bf16.mxu0 0
    %458 = vmatpush1.bf16.msra.mxu0 %v413
    %459 = vmatprep.subr.bf16.mxu0 0
    %460 = vmatpush1.bf16.msra.mxu0 %v412
    %461 = vmatprep.subr.bf16.mxu0 0
    %462 = vmatpush1.bf16.msra.mxu0 %v411
    %463 = vmatprep.subr.bf16.mxu0 0
    %464 = vmatpush1.bf16.msra.mxu0 %v410
    %465 = vmatprep.subr.bf16.mxu0 0
    %466 = vmatpush1.bf16.msra.mxu0 %v409
    %467 = vmatprep.subr.bf16.mxu0 0
    %468 = vmatpush1.bf16.msra.mxu0 %v408
    %469 = vmatprep.subr.bf16.mxu0 0
    %470 = vmatpush1.bf16.msra.mxu0 %v407
    %471 = vmatprep.subr.bf16.mxu0 0
    %472 = vmatpush2.bf16.msra.mxu0 %v422
    %473 = vmatprep.subr.bf16.mxu0 0
    %474 = vmatpush2.bf16.msra.mxu0 %v421
    %475 = vmatprep.subr.bf16.mxu0 0
    %476 = vmatpush2.bf16.msra.mxu0 %v420
    %477 = vmatprep.subr.bf16.mxu0 0
    %478 = vmatpush2.bf16.msra.mxu0 %v419
    %479 = vmatprep.subr.bf16.mxu0 0
    %480 = vmatpush2.bf16.msra.mxu0 %v418
    %481 = vmatprep.subr.bf16.mxu0 0
    %482 = vmatpush2.bf16.msra.mxu0 %v417
    %483 = vmatprep.subr.bf16.mxu0 0
    %484 = vmatpush2.bf16.msra.mxu0 %v416
    %485 = vmatprep.subr.bf16.mxu0 0
    %486 = vmatpush2.bf16.msra.mxu0 %v415
    %487 = vmatprep.mubr.bf16.mxu0 %v253
    %488 = vmatmul.mubr.bf16.gmra.mxu0 %v252
    %v489 = vpop.f32.mrf.mxu0
    %v490 = vadd.f32 %v309, %v489
    %v491 = vpop.f32.mrf.mxu0
    %v492 = vpop.f32.mrf.mxu0
    %v493 = vpop.f32.mrf.mxu0
    %494 = vdwg.mxu0
    %495 = vmatprep.subr.bf16.mxu0 0
    %496 = vmatpush1.bf16.msra.mxu0 %v430
    %497 = vmatprep.subr.bf16.mxu0 0
    %498 = vmatpush1.bf16.msra.mxu0 %v429
    %499 = vmatprep.subr.bf16.mxu0 0
    %500 = vmatpush1.bf16.msra.mxu0 %v428
    %501 = vmatprep.subr.bf16.mxu0 0
    %502 = vmatpush1.bf16.msra.mxu0 %v427
    %503 = vmatprep.subr.bf16.mxu0 0
    %504 = vmatpush1.bf16.msra.mxu0 %v426
    %505 = vmatprep.subr.bf16.mxu0 0
    %506 = vmatpush1.bf16.msra.mxu0 %v425
    %507 = vmatprep.subr.bf16.mxu0 0
    %508 = vmatpush1.bf16.msra.mxu0 %v424
    %509 = vmatprep.subr.bf16.mxu0 0
    %510 = vmatpush1.bf16.msra.mxu0 %v423
    %511 = vmatprep.subr.bf16.mxu0 0
    %512 = vmatpush2.bf16.msra.mxu0 0
    %513 = vmatprep.subr.bf16.mxu0 0
    %514 = vmatpush2.bf16.msra.mxu0 0
    %515 = vmatprep.subr.bf16.mxu0 0
    %516 = vmatpush2.bf16.msra.mxu0 0
    %517 = vmatprep.subr.bf16.mxu0 0
    %518 = vmatpush2.bf16.msra.mxu0 0
    %519 = vmatprep.subr.bf16.mxu0 0
    %520 = vmatpush2.bf16.msra.mxu0 0
    %521 = vmatprep.subr.bf16.mxu0 0
    %522 = vmatpush2.bf16.msra.mxu0 0
    %523 = vmatprep.subr.bf16.mxu0 0
    %524 = vmatpush2.bf16.msra.mxu0 0
    %525 = vmatprep.subr.bf16.mxu0 0
    %526 = vmatpush2.bf16.msra.mxu0 0
    %527 = vmatprep.mubr.bf16.mxu0 0
    %528 = vmatmul.mubr.bf16.gmra.mxu0 %v255
    %v529 = vpop.f32.mrf.mxu0
    %v530 = vadd.f32 %v490, %v529
    %v531 = vpop.f32.mrf.mxu0
    %v532 = vpop.f32.mrf.mxu0
    %v533 = vpop.f32.mrf.mxu0
    %534 = vdwg.mxu0
    %v535 = vpack.c.bf16 %v530, %v530
    %536 = vst [vmem:[#allocation8] sm:$0xf] %v535
    // Predicated region
    $region50: #{tpu_custom_call.1} parent=1 // pred_check
      _
    $region51: #{tpu_custom_call.1} parent=1 // pred_check_branch
      %538 = sbr.rel (0) target = $region53
    $region52: #{tpu_custom_call.1} parent=1 // pred_region
      %s540 = ssub.s32 64, 64
      %541 = vsyncadd [#allocation4], %s540
      %s543 = sshll.u32 [#allocation8], 4
      %s544 = int_to_ptr.vmem [resolvable:$true] %s543
      %546 = dma.vmem_to_hbm [thread:$0]  %s544, 64, %s9, [#allocation4]
    $region53: #{tpu_custom_call.1} parent=1 // pred_fallthru
      _
    // Predicated region
    $region54: #{tpu_custom_call.1} parent=1 // pred_check
      _
    $region55: #{tpu_custom_call.1} parent=1 // pred_check_branch
      %548 = sbr.rel (0) target = $region57
    $region56: #{tpu_custom_call.1} parent=1 // pred_region
      %549 = dma.done [#allocation4], 64
    $region57: #{tpu_custom_call.1} parent=1 // pred_fallthru
      _
    %550 = vsyncpa [#allocation3], 1
    %551 = vsyncpa [#allocation6], 1
    %552 = vsyncpa [#allocation4], 1

</llo_original>
